<compile_context>
chip_gen: v7x
topology: tpu7x:2x2x1
jax: 0.10.0
libtpu: 0.0.40
codegen_flags: <defaults>
</compile_context>

<pallas_src>
import functools
import math

import numpy as np
import jax
import jax.numpy as jnp
from jax.experimental import pallas as pl
from jax.experimental.pallas import tpu as pltpu


_SELU_ALPHA = 1.6732632423543772848170429916717
_SELU_LAMBDA = 1.0507009873554804934193349852946


# --------------------------------------------------------------------------- kernel
def _basic_conv_kernel(x0_ref, x1_ref, w_ref, bias_ref, o_ref, *scratch,
                       tile_h, w_out, k, cin, cout, use_relu, deep, collapse_out):
    """One (batch, row-tile) grid step: KxK conv (stride 1) + folded BN + activation.

    x0_ref  : (1, tile_h, Wp, Cin)   padded-input rows [t*tile_h, (t+1)*tile_h)
    x1_ref  : (1, K-1, Wp, Cin)      exactly the K-1 halo rows below the band
                                     (dummy 1-row block when K == 1, never read)
    w_ref   : folded weights: (Cin, Cout) | (K*K*Cin, Cout) | (K, K*Cin, Cout)
    bias_ref: (1, Cout) f32          folded BN bias
    o_ref   : (1, tile_h, W_out*Cout) when collapse_out else (1, tile_h, W_out, Cout)
    scratch : [slab (tile_h+K-1, W_out, K*Cin)]  (+ [patches (tile_h, W_out, K*K*Cin)]
              in deep mode)
    """
    if k == 1:
        p = x0_ref[0].reshape(tile_h * w_out, cin)
        acc = jnp.dot(p, w_ref[...], preferred_element_type=jnp.float32)
    else:
        slab_ref = scratch[0]
        # Width-folded im2col slab, built ONCE per step directly from the two input
        # views (no intermediate band copy; K copies instead of K*K per-kh copies).
        for kw in range(k):
            c0 = kw * cin
            slab_ref[:tile_h, :, c0:c0 + cin] = x0_ref[0, :, kw:kw + w_out, :]
            slab_ref[tile_h:, :, c0:c0 + cin] = x1_ref[0, :, kw:kw + w_out, :]

        if deep:
            # Small K*Cin: fold kh into the contraction too -> ONE MXU matmul of
            # depth K*K*Cin (avoids K shallow, MXU-underfilled matmuls).
            patches_ref = scratch[1]
            for kh in range(k):
                patches_ref[:, :, kh * k * cin:(kh + 1) * k * cin] = \
                    slab_ref[kh:kh + tile_h]
            p = patches_ref[...].reshape(tile_h * w_out, k * k * cin)
            acc = jnp.dot(p, w_ref[...], preferred_element_type=jnp.float32)
        else:
            # Large K*Cin: K matmuls of depth K*Cin on free leading-dim slices of the
            # slab; accumulate in vregs (no VMEM accumulator round trips).
            acc = None
            for kh in range(k):
                p = slab_ref[kh:kh + tile_h].reshape(tile_h * w_out, k * cin)
                contrib = jnp.dot(p, w_ref[kh], preferred_element_type=jnp.float32)
                acc = contrib if acc is None else acc + contrib

    # Folded-BN bias + activation epilogue (scale already folded into the weights).
    y = acc + bias_ref[...]
    if use_relu:
        y = jnp.maximum(y, 0.0)
    else:  # SELU (PyTorch nn.SELU constants)
        y = _SELU_LAMBDA * jnp.where(
            y > 0.0, y, _SELU_ALPHA * (jnp.exp(jnp.minimum(y, 0.0)) - 1.0))

    if collapse_out:
        o_ref[0] = y.reshape(tile_h, w_out * cout).astype(o_ref.dtype)
    else:
        o_ref[0] = y.reshape(tile_h, w_out, cout).astype(o_ref.dtype)


# --------------------------------------------------------------------------- helpers
def _vmem_capacity_bytes():
    """Physical VMEM per TensorCore (128 MiB v5e/v6e, 64 MiB v7x); conservative fallback."""
    try:
        info = pltpu.get_tpu_info()
        for attr in ("vmem_capacity_bytes", "vmem_bytes", "vmem_size_bytes"):
            v = getattr(info, attr, None)
            if v is not None and int(v) > 0:
                return int(v)
    except Exception:
        pass
    return 64 * 1024 * 1024


def _step_vmem_bytes(tile_h, *, wp, w_out, cin, cout, k, in_isz, out_isz, deep):
    """Per-grid-step VMEM footprint: double-buffered pipelined operands + scratch."""
    halo = k - 1
    x0 = tile_h * wp * cin * in_isz
    x1 = max(halo, 1) * wp * cin * in_isz
    out = tile_h * w_out * cout * out_isz
    wgt = k * k * cin * cout * in_isz
    bias = cout * 4
    scratch = 0
    if k > 1:
        scratch += (tile_h + halo) * w_out * k * cin * in_isz        # im2col slab
        if deep:
            scratch += tile_h * w_out * k * k * cin * in_isz         # deep patches
    return 2 * (x0 + x1 + out + wgt + bias) + scratch


def _pick_tile_h(h_out, base, budget, step_bytes):
    """Largest tile_h (multiple of `base`; also a multiple of 8 unless it covers the
    whole image) whose per-step footprint fits `budget`."""
    max_tile = ((h_out + base - 1) // base) * base
    cands = [max_tile]
    th = max_tile - base
    while th >= base:
        if th % 8 == 0:
            cands.append(th)
        th -= base
    for th in cands:                       # descending
        if step_bytes(th) <= budget:
            return th
    return cands[-1]


@functools.lru_cache(maxsize=None)
def _lane_collapse_supported(rows, w_out, cout):
    """Probe whether Mosaic can lower the (rows*w_out, cout) -> (rows, w_out*cout)
    value reshape used for the lane-dense output store; fall back to the plain 4-D
    store when unsupported on this jax/libtpu version."""
    def _probe(x_ref, o_ref):
        o_ref[...] = x_ref[...].reshape(rows, w_out * cout)

    try:
        x = jnp.arange(rows * w_out * cout, dtype=jnp.float32).reshape(rows * w_out, cout)
        out = pl.pallas_call(
            _probe,
            out_shape=jax.ShapeDtypeStruct((rows, w_out * cout), jnp.float32))(x)
        return bool(jnp.array_equal(out, x.reshape(rows, w_out * cout)))
    except Exception:
        return False


# --------------------------------------------------------------------------- wrappers
def basic_conv_forward_nhwc(x_nhwc, weight, gamma, beta, running_mean, running_var,
                            *, kernel_size, stride=1, padding=0, dilation=1, groups=1,
                            eps=1e-5, use_relu=True, use_bn=True, tile_h=None,
                            compute_dtype=None, vmem_budget_bytes=None):
    """Pallas BasicConv forward, NHWC activations (preferred entry point).

    x_nhwc: (N, H, W, Cin); weight: (Cout, Cin, K, K) PyTorch layout.
    Returns (N, H_out, W_out, Cout).  stride=1, dilation=1, groups=1 only.
    """
    if stride != 1 or dilation != 1 or groups != 1:
        raise NotImplementedError("only stride=1, dilation=1, groups=1 supported")

    n, h, w, cin = x_nhwc.shape
    cout = weight.shape[0]
    k = kernel_size
    h_out = h + 2 * padding - k + 1
    w_out = w + 2 * padding - k + 1
    wp = w + 2 * padding
    halo = k - 1

    out_dtype = x_nhwc.dtype
    cd = np.dtype(x_nhwc.dtype) if compute_dtype is None else np.dtype(compute_dtype)
    in_isz = cd.itemsize
    out_isz = np.dtype(out_dtype).itemsize

    # Deep-contraction mode: when K*Cin badly underfills the MXU, fold kh into the
    # contraction too and issue a single matmul of depth K*K*Cin per step.
    deep = (k > 1) and (k * cin < 128)

    # ---- per-generation VMEM budget (~48 MiB on 128 MiB chips, ~24 MiB on v7x) ----
    cap = _vmem_capacity_bytes()
    if vmem_budget_bytes is None:
        vmem_budget_bytes = max(8 << 20, (cap * 3) // 8)

    step_bytes = functools.partial(_step_vmem_bytes, wp=wp, w_out=w_out, cin=cin,
                                   cout=cout, k=k, in_isz=in_isz, out_isz=out_isz,
                                   deep=deep)
    base = max(halo, 1)
    if tile_h is None:
        tile_h = _pick_tile_h(h_out, base, vmem_budget_bytes, step_bytes)
    if tile_h < 1:
        raise ValueError("tile_h must be >= 1")
    if k > 1 and tile_h % halo != 0:
        raise ValueError(f"tile_h={tile_h} must be a multiple of kernel_size-1={halo} "
                         "(enables the exact (K-1)-row halo block)")
    num_h = -(-h_out // tile_h)
    padded_h_out = num_h * tile_h
    if num_h > 1 and tile_h % 8 != 0:
        raise ValueError(f"tile_h={tile_h} must be a multiple of 8 when it does not "
                         f"cover all {h_out} output rows")

    # ---- glue (plain JAX, outside the kernel) ----
    extra_rows = padded_h_out - h_out
    x_pad = jnp.pad(
        x_nhwc, ((0, 0), (padding, padding + extra_rows), (padding, padding), (0, 0))
    ).astype(cd)

    # Fold eval-mode BatchNorm: scale into the conv weights, bias kept per-channel.
    if use_bn:
        scale = gamma / jnp.sqrt(running_var + eps)
        bias = beta - running_mean * scale
    else:
        scale = jnp.ones((cout,), jnp.float32)
        bias = jnp.zeros((cout,), jnp.float32)
    w_hwio = jnp.transpose(weight, (2, 3, 1, 0)).astype(jnp.float32)   # OIHW -> HWIO
    w_folded = w_hwio * scale[None, None, None, :]
    if k == 1:
        w_kernel = w_folded.reshape(cin, cout)
        w_spec = pl.BlockSpec((cin, cout), lambda b, t: (0, 0))
    elif deep:
        w_kernel = w_folded.reshape(k * k * cin, cout)       # (kh, kw, ci)-major
        w_spec = pl.BlockSpec((k * k * cin, cout), lambda b, t: (0, 0))
    else:
        w_kernel = w_folded.reshape(k, k * cin, cout)
        w_spec = pl.BlockSpec((k, k * cin, cout), lambda b, t: (0, 0, 0))
    w_kernel = w_kernel.astype(cd)
    bias = bias.reshape(1, cout).astype(jnp.float32)
    bias_spec = pl.BlockSpec((1, cout), lambda b, t: (0, 0))

    # ---- input views: full row band + exact (K-1)-row halo ----
    # (pipeline_mode=pl.Buffered(3) on x0_spec is a cheap extra knob if DMA is exposed.)
    x0_spec = pl.BlockSpec((1, tile_h, wp, cin), lambda b, t: (b, t, 0, 0))
    if k > 1:
        m = tile_h // halo
        x1_spec = pl.BlockSpec((1, halo, wp, cin), lambda b, t: (b, (t + 1) * m, 0, 0))
    else:
        x1_spec = pl.BlockSpec((1, 1, wp, cin), lambda b, t: (b, 0, 0, 0))  # unused

    # ---- lane-dense output: collapse (W_out, Cout) when Cout is lane-sparse ----
    collapse_out = cout < 128 and _lane_collapse_supported(tile_h, w_out, cout)
    if collapse_out:
        out_shape = jax.ShapeDtypeStruct((n, padded_h_out, w_out * cout), out_dtype)
        out_spec = pl.BlockSpec((1, tile_h, w_out * cout), lambda b, t: (b, t, 0))
    else:
        out_shape = jax.ShapeDtypeStruct((n, padded_h_out, w_out, cout), out_dtype)
        out_spec = pl.BlockSpec((1, tile_h, w_out, cout), lambda b, t: (b, t, 0, 0))

    scratch_shapes = []
    if k > 1:
        scratch_shapes.append(pltpu.VMEM((tile_h + halo, w_out, k * cin), cd))
        if deep:
            scratch_shapes.append(pltpu.VMEM((tile_h, w_out, k * k * cin), cd))

    kernel = functools.partial(
        _basic_conv_kernel, tile_h=tile_h, w_out=w_out, k=k, cin=cin, cout=cout,
        use_relu=use_relu, deep=deep, collapse_out=collapse_out)

    working = step_bytes(tile_h)
    vmem_limit = int(min(cap, max(working + (4 << 20), 16 << 20)))

    flops = 2 * n * padded_h_out * w_out * cout * cin * k * k
    transcendentals = 0 if use_relu else n * padded_h_out * w_out * cout
    bytes_accessed = (x_pad.size * in_isz
                      + n * num_h * max(halo, 1) * wp * cin * in_isz    # halo re-reads
                      + w_kernel.size * in_isz
                      + n * padded_h_out * w_out * cout * out_isz)

    out = pl.pallas_call(
        kernel,
        out_shape=out_shape,
        grid=(n, num_h),
        in_specs=[x0_spec, x1_spec, w_spec, bias_spec],
        out_specs=out_spec,
        scratch_shapes=scratch_shapes,
        compiler_params=pltpu.CompilerParams(
            dimension_semantics=("parallel", "parallel"),
            vmem_limit_bytes=vmem_limit),
        cost_estimate=pl.CostEstimate(flops=flops,
                                      transcendentals=transcendentals,
                                      bytes_accessed=bytes_accessed),
    )(x_pad, x_pad, w_kernel, bias)

    if extra_rows:
        out = out[:, :h_out]
    if collapse_out:
        out = out.reshape(n, h_out, w_out, cout)
    return out


def basic_conv_forward(x_nchw, weight, gamma, beta, running_mean, running_var,
                       *, kernel_size, stride=1, padding=0, dilation=1, groups=1,
                       eps=1e-5, use_relu=True, use_bn=True, tile_h=None,
                       compute_dtype=None):
    """NCHW wrapper matching the PyTorch module interface.

    NOTE: prefer basic_conv_forward_nhwc end-to-end; the two transposes here are
    full-tensor HBM passes kept only for PyTorch layout compatibility.
    """
    x_nhwc = jnp.transpose(x_nchw, (0, 2, 3, 1))
    out = basic_conv_forward_nhwc(
        x_nhwc, weight, gamma, beta, running_mean, running_var,
        kernel_size=kernel_size, stride=stride, padding=padding, dilation=dilation,
        groups=groups, eps=eps, use_relu=use_relu, use_bn=use_bn, tile_h=tile_h,
        compute_dtype=compute_dtype)
    return jnp.transpose(out, (0, 3, 1, 2))


# --------------------------------------------------------------------------- reference
def _reference(x_nchw, weight, gamma, beta, running_mean, running_var,
               *, padding, eps=1e-5, use_relu=True):
    y = jax.lax.conv_general_dilated(
        x_nchw, weight, window_strides=(1, 1),
        padding=[(padding, padding), (padding, padding)],
        dimension_numbers=("NCHW", "OIHW", "NCHW"),
        precision=jax.lax.Precision.HIGHEST)
    scale = gamma / jnp.sqrt(running_var + eps)
    bias = beta - running_mean * scale
    y = y * scale[None, :, None, None] + bias[None, :, None, None]
    if use_relu:
        return jnp.maximum(y, 0.0)
    return _SELU_LAMBDA * jnp.where(
        y > 0.0, y, _SELU_ALPHA * (jnp.exp(jnp.minimum(y, 0.0)) - 1.0))


def _run_case(key, *, n, cin, cout, hw, k, padding, use_relu, tile_h):
    kx, kw_ = jax.random.split(key)
    x = jax.random.normal(kx, (n, cin, hw, hw), dtype=jnp.float32)
    fan_in = cin * k * k
    bound = 1.0 / math.sqrt(fan_in)
    weight = jax.random.uniform(kw_, (cout, cin, k, k), jnp.float32, -bound, bound)
    gamma = jnp.linspace(0.5, 1.5, cout, dtype=jnp.float32)
    beta = jnp.linspace(-0.1, 0.1, cout, dtype=jnp.float32)
    running_mean = jnp.linspace(-0.2, 0.2, cout, dtype=jnp.float32)
    running_var = jnp.linspace(0.8, 1.2, cout, dtype=jnp.float32)

    out = basic_conv_forward(x, weight, gamma, beta, running_mean, running_var,
                             kernel_size=k, padding=padding, use_relu=use_relu,
                             tile_h=tile_h)
    out = jax.block_until_ready(out)

    ref = _reference(x, weight, gamma, beta, running_mean, running_var,
                     padding=padding, use_relu=use_relu)
    assert out.shape == ref.shape, (out.shape, ref.shape)
    err = float(jnp.max(jnp.abs(out - ref)))
    assert err < 2e-3, err


if __name__ == "__main__":
    key = jax.random.PRNGKey(0)
    k0, k1, k2 = jax.random.split(key, 3)

    # Generic 3x3 conv + BN + ReLU; user-chosen tile (grid = 2 batches x 2 row tiles),
    # deep-contraction path (K*Cin = 12), lane-dense collapsed output (16*8 = 128).
    _run_case(k0, n=2, cin=4, cout=8, hw=16, k=3, padding=1, use_relu=True, tile_h=8)

    # CBAM SpatialGate config: BasicConv(2, 1, 7, padding=3, relu=False) -> SELU path,
    # K=7 halo (6 rows), auto tile (whole image in one step), deep path (K*K*Cin = 98).
    _run_case(k1, n=2, cin=2, cout=1, hw=16, k=7, padding=3, use_relu=False,
              tile_h=None)

    # Wider channels: per-kh matmul path (K*Cin = 192 >= 128) with vreg accumulation.
    _run_case(k2, n=1, cin=64, cout=32, hw=8, k=3, padding=1, use_relu=True,
              tile_h=None)

    print("KERNEL_OK")
</pallas_src>

<mosaic_0001>
module attributes {stable_mosaic.version = 11 : i64} {
  func.func @_probe(%arg0: memref<128x8xf32, #tpu.memory_space<vmem>>, %arg1: memref<8x128xf32, #tpu.memory_space<vmem>>) attributes {dimension_semantics = [], scalar_prefetch = 0 : i64, scratch_operands = 0 : i64, tpu.core_type = #tpu.core_type<tc>} {
    %c0 = arith.constant 0 : index
    %c0_0 = arith.constant 0 : index
    %0 = vector.load %arg0[%c0, %c0_0] : memref<128x8xf32, #tpu.memory_space<vmem>>, vector<128x8xf32>
    %1 = vector.shape_cast %0 : vector<128x8xf32> to vector<8x128xf32>
    %c0_1 = arith.constant 0 : index
    %c0_2 = arith.constant 0 : index
    %2 = vector.load %arg1[%c0_1, %c0_2] : memref<8x128xf32, #tpu.memory_space<vmem>>, vector<8x128xf32>
    tpu.vector_store %arg1[%c0_1, %c0_2], %1 {strides = array<i32>} : memref<8x128xf32, #tpu.memory_space<vmem>>, vector<8x128xf32>,
    return
  }
}

module attributes {stable_mosaic.version = 11 : i64} {
  func.func @_basic_conv_kernel(%arg0: i32, %arg1: i32, %arg2: memref<1x8x18x4xf32, #tpu.memory_space<vmem>>, %arg3: memref<1x2x18x4xf32, #tpu.memory_space<vmem>>, %arg4: memref<36x8xf32, #tpu.memory_space<vmem>>, %arg5: memref<1x8xf32, #tpu.memory_space<vmem>>, %arg6: memref<1x8x16x8xf32, #tpu.memory_space<vmem>>, %arg7: memref<10x16x12xf32, #tpu.memory_space<vmem>>, %arg8: memref<8x16x36xf32, #tpu.memory_space<vmem>>) attributes {dimension_semantics = [#tpu.dimension_semantics<parallel>, #tpu.dimension_semantics<parallel>], iteration_bounds = array<i64: 2, 2>, scalar_prefetch = 0 : i64, scratch_operands = 2 : i64, tpu.core_type = #tpu.core_type<tc>, window_params = [{transform_indices = @transform_0, window_bounds = array<i64: 1, 8, 18, 4>}, {transform_indices = @transform_1, window_bounds = array<i64: 1, 2, 18, 4>}, {pipeline_mode = #tpu.pipeline_mode<synchronous>, transform_indices = @transform_2, window_bounds = array<i64: 36, 8>}, {pipeline_mode = #tpu.pipeline_mode<synchronous>, transform_indices = @transform_3, window_bounds = array<i64: 1, 8>}, {transform_indices = @transform_4, window_bounds = array<i64: 1, 8, 16, 8>}]} {
    %c0 = arith.constant 0 : index
    %c0_0 = arith.constant 0 : index
    %c0_1 = arith.constant 0 : index
    %c0_2 = arith.constant 0 : index
    %0 = vector.load %arg2[%c0, %c0_0, %c0_1, %c0_2] : memref<1x8x18x4xf32, #tpu.memory_space<vmem>>, vector<1x8x16x4xf32>
    %1 = vector.shape_cast %0 : vector<1x8x16x4xf32> to vector<8x16x4xf32>
    %c0_3 = arith.constant 0 : index
    %c0_4 = arith.constant 0 : index
    %c0_5 = arith.constant 0 : index
    %2 = vector.load %arg7[%c0_3, %c0_4, %c0_5] : memref<10x16x12xf32, #tpu.memory_space<vmem>>, vector<8x16x4xf32>
    tpu.vector_store %arg7[%c0_3, %c0_4, %c0_5], %1 {strides = array<i32>} : memref<10x16x12xf32, #tpu.memory_space<vmem>>, vector<8x16x4xf32>,
    %c0_6 = arith.constant 0 : index
    %c0_7 = arith.constant 0 : index
    %c0_8 = arith.constant 0 : index
    %c0_9 = arith.constant 0 : index
    %3 = vector.load %arg3[%c0_6, %c0_7, %c0_8, %c0_9] : memref<1x2x18x4xf32, #tpu.memory_space<vmem>>, vector<1x2x16x4xf32>
    %4 = vector.shape_cast %3 : vector<1x2x16x4xf32> to vector<2x16x4xf32>
    %c8 = arith.constant 8 : index
    %c0_10 = arith.constant 0 : index
    %c0_11 = arith.constant 0 : index
    %5 = vector.load %arg7[%c8, %c0_10, %c0_11] : memref<10x16x12xf32, #tpu.memory_space<vmem>>, vector<2x16x4xf32>
    tpu.vector_store %arg7[%c8, %c0_10, %c0_11], %4 {strides = array<i32>} : memref<10x16x12xf32, #tpu.memory_space<vmem>>, vector<2x16x4xf32>,
    %c0_12 = arith.constant 0 : index
    %c0_13 = arith.constant 0 : index
    %c1 = arith.constant 1 : index
    %c0_14 = arith.constant 0 : index
    %6 = vector.load %arg2[%c0_12, %c0_13, %c1, %c0_14] : memref<1x8x18x4xf32, #tpu.memory_space<vmem>>, vector<1x8x16x4xf32>
    %7 = vector.shape_cast %6 : vector<1x8x16x4xf32> to vector<8x16x4xf32>
    %c0_15 = arith.constant 0 : index
    %c0_16 = arith.constant 0 : index
    %c4 = arith.constant 4 : index
    %8 = vector.load %arg7[%c0_15, %c0_16, %c4] : memref<10x16x12xf32, #tpu.memory_space<vmem>>, vector<8x16x4xf32>
    tpu.vector_store %arg7[%c0_15, %c0_16, %c4], %7 {strides = array<i32>} : memref<10x16x12xf32, #tpu.memory_space<vmem>>, vector<8x16x4xf32>,
    %c0_17 = arith.constant 0 : index
    %c0_18 = arith.constant 0 : index
    %c1_19 = arith.constant 1 : index
    %c0_20 = arith.constant 0 : index
    %9 = vector.load %arg3[%c0_17, %c0_18, %c1_19, %c0_20] : memref<1x2x18x4xf32, #tpu.memory_space<vmem>>, vector<1x2x16x4xf32>
    %10 = vector.shape_cast %9 : vector<1x2x16x4xf32> to vector<2x16x4xf32>
    %c8_21 = arith.constant 8 : index
    %c0_22 = arith.constant 0 : index
    %c4_23 = arith.constant 4 : index
    %11 = vector.load %arg7[%c8_21, %c0_22, %c4_23] : memref<10x16x12xf32, #tpu.memory_space<vmem>>, vector<2x16x4xf32>
    tpu.vector_store %arg7[%c8_21, %c0_22, %c4_23], %10 {strides = array<i32>} : memref<10x16x12xf32, #tpu.memory_space<vmem>>, vector<2x16x4xf32>,
    %c0_24 = arith.constant 0 : index
    %c0_25 = arith.constant 0 : index
    %c2 = arith.constant 2 : index
    %c0_26 = arith.constant 0 : index
    %12 = vector.load %arg2[%c0_24, %c0_25, %c2, %c0_26] : memref<1x8x18x4xf32, #tpu.memory_space<vmem>>, vector<1x8x16x4xf32>
    %13 = vector.shape_cast %12 : vector<1x8x16x4xf32> to vector<8x16x4xf32>
    %c0_27 = arith.constant 0 : index
    %c0_28 = arith.constant 0 : index
    %c8_29 = arith.constant 8 : index
    %14 = vector.load %arg7[%c0_27, %c0_28, %c8_29] : memref<10x16x12xf32, #tpu.memory_space<vmem>>, vector<8x16x4xf32>
    tpu.vector_store %arg7[%c0_27, %c0_28, %c8_29], %13 {strides = array<i32>} : memref<10x16x12xf32, #tpu.memory_space<vmem>>, vector<8x16x4xf32>,
    %c0_30 = arith.constant 0 : index
    %c0_31 = arith.constant 0 : index
    %c2_32 = arith.constant 2 : index
    %c0_33 = arith.constant 0 : index
    %15 = vector.load %arg3[%c0_30, %c0_31, %c2_32, %c0_33] : memref<1x2x18x4xf32, #tpu.memory_space<vmem>>, vector<1x2x16x4xf32>
    %16 = vector.shape_cast %15 : vector<1x2x16x4xf32> to vector<2x16x4xf32>
    %c8_34 = arith.constant 8 : index
    %c0_35 = arith.constant 0 : index
    %c8_36 = arith.constant 8 : index
    %17 = vector.load %arg7[%c8_34, %c0_35, %c8_36] : memref<10x16x12xf32, #tpu.memory_space<vmem>>, vector<2x16x4xf32>
    tpu.vector_store %arg7[%c8_34, %c0_35, %c8_36], %16 {strides = array<i32>} : memref<10x16x12xf32, #tpu.memory_space<vmem>>, vector<2x16x4xf32>,
    %c0_37 = arith.constant 0 : index
    %c0_38 = arith.constant 0 : index
    %c0_39 = arith.constant 0 : index
    %18 = vector.load %arg7[%c0_37, %c0_38, %c0_39] : memref<10x16x12xf32, #tpu.memory_space<vmem>>, vector<8x16x12xf32>
    %c0_40 = arith.constant 0 : index
    %c0_41 = arith.constant 0 : index
    %c0_42 = arith.constant 0 : index
    %19 = vector.load %arg8[%c0_40, %c0_41, %c0_42] : memref<8x16x36xf32, #tpu.memory_space<vmem>>, vector<8x16x12xf32>
    tpu.vector_store %arg8[%c0_40, %c0_41, %c0_42], %18 {strides = array<i32>} : memref<8x16x36xf32, #tpu.memory_space<vmem>>, vector<8x16x12xf32>,
    %c1_43 = arith.constant 1 : index
    %c0_44 = arith.constant 0 : index
    %c0_45 = arith.constant 0 : index
    %20 = vector.load %arg7[%c1_43, %c0_44, %c0_45] : memref<10x16x12xf32, #tpu.memory_space<vmem>>, vector<8x16x12xf32>
    %c0_46 = arith.constant 0 : index
    %c0_47 = arith.constant 0 : index
    %c12 = arith.constant 12 : index
    %21 = vector.load %arg8[%c0_46, %c0_47, %c12] : memref<8x16x36xf32, #tpu.memory_space<vmem>>, vector<8x16x12xf32>
    tpu.vector_store %arg8[%c0_46, %c0_47, %c12], %20 {strides = array<i32>} : memref<8x16x36xf32, #tpu.memory_space<vmem>>, vector<8x16x12xf32>,
    %c2_48 = arith.constant 2 : index
    %c0_49 = arith.constant 0 : index
    %c0_50 = arith.constant 0 : index
    %22 = vector.load %arg7[%c2_48, %c0_49, %c0_50] : memref<10x16x12xf32, #tpu.memory_space<vmem>>, vector<8x16x12xf32>
    %c0_51 = arith.constant 0 : index
    %c0_52 = arith.constant 0 : index
    %c24 = arith.constant 24 : index
    %23 = vector.load %arg8[%c0_51, %c0_52, %c24] : memref<8x16x36xf32, #tpu.memory_space<vmem>>, vector<8x16x12xf32>
    tpu.vector_store %arg8[%c0_51, %c0_52, %c24], %22 {strides = array<i32>} : memref<8x16x36xf32, #tpu.memory_space<vmem>>, vector<8x16x12xf32>,
    %c0_53 = arith.constant 0 : index
    %c0_54 = arith.constant 0 : index
    %c0_55 = arith.constant 0 : index
    %24 = vector.load %arg8[%c0_53, %c0_54, %c0_55] : memref<8x16x36xf32, #tpu.memory_space<vmem>>, vector<8x16x36xf32>
    %25 = vector.shape_cast %24 : vector<8x16x36xf32> to vector<128x36xf32>
    %c0_56 = arith.constant 0 : index
    %c0_57 = arith.constant 0 : index
    %26 = vector.load %arg4[%c0_56, %c0_57] : memref<36x8xf32, #tpu.memory_space<vmem>>, vector<36x8xf32>
    %cst = arith.constant dense<0.000000e+00> : vector<128x8xf32>
    %27 = tpu.matmul %25, %26, %cst {dimension_numbers = #tpu.dot_dimension_numbers<[1], [0], [0], [1], [0, 0, 1, 1], [], []>} : vector<128x36xf32>, vector<36x8xf32>, vector<128x8xf32> -> vector<128x8xf32>
    %c0_58 = arith.constant 0 : index
    %c0_59 = arith.constant 0 : index
    %28 = vector.load %arg5[%c0_58, %c0_59] : memref<1x8xf32, #tpu.memory_space<vmem>>, vector<1x8xf32>
    %29 = vector.broadcast %28 : vector<1x8xf32> to vector<128x8xf32>
    %30 = arith.addf %27, %29 : vector<128x8xf32>
    %cst_60 = arith.constant 0.000000e+00 : f32
    %31 = vector.broadcast %cst_60 : f32 to vector<128x8xf32>
    %32 = arith.maximumf %30, %31 : vector<128x8xf32>
    %33 = vector.shape_cast %32 : vector<128x8xf32> to vector<8x16x8xf32>
    %c0_61 = arith.constant 0 : index
    %c0_62 = arith.constant 0 : index
    %c0_63 = arith.constant 0 : index
    %c0_64 = arith.constant 0 : index
    %34 = vector.load %arg6[%c0_61, %c0_62, %c0_63, %c0_64] : memref<1x8x16x8xf32, #tpu.memory_space<vmem>>, vector<1x8x16x8xf32>
    %35 = vector.shape_cast %34 : vector<1x8x16x8xf32> to vector<8x16x8xf32>
    %36 = vector.shape_cast %33 : vector<8x16x8xf32> to vector<1x8x16x8xf32>
    tpu.vector_store %arg6[%c0_61, %c0_62, %c0_63, %c0_64], %36 {strides = array<i32>} : memref<1x8x16x8xf32, #tpu.memory_space<vmem>>, vector<1x8x16x8xf32>,
    return
  }
  func.func @transform_0(%arg0: i32, %arg1: i32) -> (i32, i32, i32, i32) {
    %c0_i32 = arith.constant 0 : i32
    %c0_i32_0 = arith.constant 0 : i32
    %c0_i32_1 = arith.constant 0 : i32
    return %arg0, %arg1, %c0_i32, %c0_i32_0 : i32, i32, i32, i32
  }
  func.func @transform_1(%arg0: i32, %arg1: i32) -> (i32, i32, i32, i32) {
    %c1_i32 = arith.constant 1 : i32
    %0 = arith.addi %arg1, %c1_i32 : i32
    %c4_i32 = arith.constant 4 : i32
    %1 = arith.muli %0, %c4_i32 : i32
    %c0_i32 = arith.constant 0 : i32
    %c0_i32_0 = arith.constant 0 : i32
    %c0_i32_1 = arith.constant 0 : i32
    return %arg0, %1, %c0_i32, %c0_i32_0 : i32, i32, i32, i32
  }
  func.func @transform_2(%arg0: i32, %arg1: i32) -> (i32, i32) {
    %c0_i32 = arith.constant 0 : i32
    %c0_i32_0 = arith.constant 0 : i32
    %c0_i32_1 = arith.constant 0 : i32
    return %c0_i32, %c0_i32_0 : i32, i32
  }
  func.func @transform_3(%arg0: i32, %arg1: i32) -> (i32, i32) {
    %c0_i32 = arith.constant 0 : i32
    %c0_i32_0 = arith.constant 0 : i32
    %c0_i32_1 = arith.constant 0 : i32
    return %c0_i32, %c0_i32_0 : i32, i32
  }
  func.func @transform_4(%arg0: i32, %arg1: i32) -> (i32, i32, i32, i32) {
    %c0_i32 = arith.constant 0 : i32
    %c0_i32_0 = arith.constant 0 : i32
    %c0_i32_1 = arith.constant 0 : i32
    return %arg0, %arg1, %c0_i32, %c0_i32_0 : i32, i32, i32, i32
  }
}

</mosaic_0001>

<llo_original>
// kernel: tpu_custom_call.1
$region0: #{tpu_custom_call.1}
  #allocation0 [shape = 'u32[]', space=smem, size = 0x4, offset = 0x4, fixed_abs, tag = 'smem constant byte address 0x4 - core index']
  #allocation1 [shape = 'u32[144,128]{1,0:T(1,128)}', space=vmem, size = 0x12000, scoped, tag = 'internal scratch']
  #allocation2 [shape = 'f32[10,16,12]{2,1,0:T(8,128)}', space=vmem, size = 0x14000, scoped, tag = 'scratch operand']
  #allocation3 [shape = 'f32[8,16,36]{2,1,0:T(8,128)}', space=vmem, size = 0x10000, scoped, tag = 'scratch operand']
  %s0 = inlined_call_operand.vmem [shape: f32[2,18,18,4], index: 0, kind: input, shape index: {}]
  %s1 = inlined_call_operand.vmem [shape: f32[2,18,18,4], index: 1, kind: input, shape index: {}]
  %s2 = inlined_call_operand.vmem [shape: f32[36,8], index: 2, kind: input, shape index: {}]
  %s3 = inlined_call_operand.vmem [shape: f32[1,8], index: 3, kind: input, shape index: {}]
  %s4 = inlined_call_operand.vmem [shape: f32[2,16,16,8], index: 4, kind: output, shape index: {}]
  %s5 = sld [smem:[#allocation0]]
  $region49: #{tpu_custom_call.1} parent=0
    _
  %s7 = ssub.s32 1, %s5
  %s8 = scalar_select 0, %s7, %s5
  loop: start=0, step=1, limit=6
  $region2: #{tpu_custom_call.1} parent=0 // loop_pre_header
    _
  $region3: #{tpu_custom_call.1} parent=0 // loop_header
    %s10 = sphi 0, %s14
    %p11 = scmp.ge.s32.totalorder %s10, 6
    %s17 = sphi 0, %s29
    %s18 = sphi 0, %s25
    %s19 = sphi 0, %s17
    %s20 = sphi 0, %s18
    %s21 = sphi 0, %s19
    %s22 = sphi 0, %s20
    %s34 = sphi 0, %s36
    %s37 = sphi 0, %s34
    %s38 = sphi 0, %s37
    %s54 = sphi 0, %s38
    %s66 = sphi 0, %s68
    %s69 = sphi 0, %s66
    %s70 = sphi 0, %s69
    %s86 = sphi 0, %s70
    %s90 = sphi 0, %s90
    %s92 = sphi 0, %s90
    %s93 = sphi 0, %s92
    %s107 = sphi 0, %s93
    %s111 = sphi 0, %s111
    %s113 = sphi 0, %s111
    %s114 = sphi 0, %s113
    %s128 = sphi 0, %s114
    %s136 = sphi 0, %s138
    %s139 = sphi 0, %s136
    %s140 = sphi 0, %s139
    %s156 = sphi 0, %s140
  $region4: #{tpu_custom_call.1} parent=0 // loop_header_branch
    %13 = sbr.rel (%p11) target = $region8
  $region5: #{tpu_custom_call.1} parent=0 // loop_body
    %s15 = ssub.s32 %s10, 1
    %s16 = ssub.s32 %s10, 2
    %s23 = sadd.s32 1, %s18
    %p24 = scmp.ge.s32.totalorder %s23, 2
    %s25 = scalar_select %p24, 0, %s23
    %s26 = sadd.s32 1, %s17
    %s27 = scalar_select %p24, %s26, %s17
    %p28 = scmp.ge.s32.totalorder %s27, 2
    %s29 = scalar_select %p28, 0, %s27
    %s30 = ssub.s32 %s17, %s29
    %s31 = ssub.s32 %s18, %s25
    %s32 = sor.u32 %s30, %s31
    %p33 = scmp.eq.s32.totalorder %s32, 0
    %s35 = sadd.s32 %s34, 1
    %s36 = scalar_select %p33, %s34, %s35
    %p39 = pneg %p33
    %p40 = scmp.eq.s32.totalorder %s10, 3
    %p41 = por %p39, %p40
    %p42 = scmp.ne.s32.totalorder %s34, %s37
    %p43 = scmp.eq.s32.totalorder %s10, 0
    %p44 = por %p42, %p43
    %p45 = scmp.ne.s32.totalorder %s34, %s37
    %p46 = scmp.eq.s32.totalorder %s15, 3
    %p47 = por %p45, %p46
    %p48 = scmp.ne.s32.totalorder %s37, %s38
    %p49 = scmp.eq.s32.totalorder %s15, 0
    %p50 = por %p48, %p49
    %p51 = scmp.ne.s32.totalorder %s37, %s38
    %p52 = scmp.eq.s32.totalorder %s16, 3
    %p53 = por %p51, %p52
    %p55 = scmp.ne.s32.totalorder %s38, %s54
    %p56 = scmp.eq.s32.totalorder %s16, 0
    %p57 = por %p55, %p56
    %s58 = sadd.s32 %s18, 1
    %s59 = smul.u32 %s58, 4
    %s60 = sadd.s32 %s25, 1
    %s61 = smul.u32 %s60, 4
    %s62 = ssub.s32 %s17, %s29
    %s63 = ssub.s32 %s59, %s61
    %s64 = sor.u32 %s62, %s63
    %p65 = scmp.eq.s32.totalorder %s64, 0
    %s67 = sadd.s32 %s66, 1
    %s68 = scalar_select %p65, %s66, %s67
    %p71 = pneg %p65
    %p72 = scmp.eq.s32.totalorder %s10, 3
    %p73 = por %p71, %p72
    %p74 = scmp.ne.s32.totalorder %s66, %s69
    %p75 = scmp.eq.s32.totalorder %s10, 0
    %p76 = por %p74, %p75
    %p77 = scmp.ne.s32.totalorder %s66, %s69
    %p78 = scmp.eq.s32.totalorder %s15, 3
    %p79 = por %p77, %p78
    %p80 = scmp.ne.s32.totalorder %s69, %s70
    %p81 = scmp.eq.s32.totalorder %s15, 0
    %p82 = por %p80, %p81
    %p83 = scmp.ne.s32.totalorder %s69, %s70
    %p84 = scmp.eq.s32.totalorder %s16, 3
    %p85 = por %p83, %p84
    %p87 = scmp.ne.s32.totalorder %s70, %s86
    %p88 = scmp.eq.s32.totalorder %s16, 0
    %p89 = por %p87, %p88
    %s91 = sadd.s32 %s90, 1
    %p94 = scmp.eq.s32.totalorder %s10, 3
    %p95 = scmp.ne.s32.totalorder %s90, %s92
    %p96 = scmp.eq.s32.totalorder %s10, 0
    %p97 = por %p95, %p96
    %p98 = scmp.ne.s32.totalorder %s90, %s92
    %p99 = scmp.eq.s32.totalorder %s15, 3
    %p100 = por %p98, %p99
    %p101 = scmp.ne.s32.totalorder %s92, %s93
    %p102 = scmp.eq.s32.totalorder %s15, 0
    %p103 = por %p101, %p102
    %p104 = scmp.ne.s32.totalorder %s92, %s93
    %p105 = scmp.eq.s32.totalorder %s16, 3
    %p106 = por %p104, %p105
    %p108 = scmp.ne.s32.totalorder %s93, %s107
    %p109 = scmp.eq.s32.totalorder %s16, 0
    %p110 = por %p108, %p109
    %s112 = sadd.s32 %s111, 1
    %p115 = scmp.eq.s32.totalorder %s10, 3
    %p116 = scmp.ne.s32.totalorder %s111, %s113
    %p117 = scmp.eq.s32.totalorder %s10, 0
    %p118 = por %p116, %p117
    %p119 = scmp.ne.s32.totalorder %s111, %s113
    %p120 = scmp.eq.s32.totalorder %s15, 3
    %p121 = por %p119, %p120
    %p122 = scmp.ne.s32.totalorder %s113, %s114
    %p123 = scmp.eq.s32.totalorder %s15, 0
    %p124 = por %p122, %p123
    %p125 = scmp.ne.s32.totalorder %s113, %s114
    %p126 = scmp.eq.s32.totalorder %s16, 3
    %p127 = por %p125, %p126
    %p129 = scmp.ne.s32.totalorder %s114, %s128
    %p130 = scmp.eq.s32.totalorder %s16, 0
    %p131 = por %p129, %p130
    %s132 = ssub.s32 %s17, %s29
    %s133 = ssub.s32 %s18, %s25
    %s134 = sor.u32 %s132, %s133
    %p135 = scmp.eq.s32.totalorder %s134, 0
    %s137 = sadd.s32 %s136, 1
    %s138 = scalar_select %p135, %s136, %s137
    %p141 = pneg %p135
    %p142 = scmp.eq.s32.totalorder %s10, 3
    %p143 = por %p141, %p142
    %p144 = scmp.ne.s32.totalorder %s136, %s139
    %p145 = scmp.eq.s32.totalorder %s10, 0
    %p146 = por %p144, %p145
    %p147 = scmp.ne.s32.totalorder %s136, %s139
    %p148 = scmp.eq.s32.totalorder %s15, 3
    %p149 = por %p147, %p148
    %p150 = scmp.ne.s32.totalorder %s139, %s140
    %p151 = scmp.eq.s32.totalorder %s15, 0
    %p152 = por %p150, %p151
    %p153 = scmp.ne.s32.totalorder %s139, %s140
    %p154 = scmp.eq.s32.totalorder %s16, 3
    %p155 = por %p153, %p154
    %p157 = scmp.ne.s32.totalorder %s140, %s156
    %p158 = scmp.eq.s32.totalorder %s16, 0
    %p159 = por %p157, %p158
    %p160 = scmp.le.s32.totalorder 1, %s10
    %p161 = scmp.lt.s32.totalorder %s10, 5
    %p162 = pnand %p160, %p161
    %p163 = pneg %p162
    // Predicated region
    $region9: #{tpu_custom_call.1} parent=5 // pred_check
      _
    $region10: #{tpu_custom_call.1} parent=5 // pred_check_branch
      %165 = sbr.rel (%p162) target = $region12
    $region11: #{tpu_custom_call.1} parent=5 // pred_region
      %s166 = ssub.s32 %s10, 1
      // Predicated region
      $region13: #{tpu_custom_call.1} parent=11 // pred_check
        %p167 = pneg %p103
      $region14: #{tpu_custom_call.1} parent=11 // pred_check_branch
        %169 = sbr.rel (%p167) target = $region16
      $region15: #{tpu_custom_call.1} parent=11 // pred_region
        _
      $region16: #{tpu_custom_call.1} parent=11 // pred_fallthru
        _
      // Predicated region
      $region17: #{tpu_custom_call.1} parent=11 // pred_check
        %p170 = pneg %p124
      $region18: #{tpu_custom_call.1} parent=11 // pred_check_branch
        %172 = sbr.rel (%p170) target = $region20
      $region19: #{tpu_custom_call.1} parent=11 // pred_region
        _
      $region20: #{tpu_custom_call.1} parent=11 // pred_fallthru
        _
    $region12: #{tpu_custom_call.1} parent=5 // pred_fallthru
      _
    %p173 = scmp.lt.s32.totalorder %s10, 4
    // Predicated region
    $region21: #{tpu_custom_call.1} parent=5 // pred_check
      %p174 = pneg %p173
    $region22: #{tpu_custom_call.1} parent=5 // pred_check_branch
      %176 = sbr.rel (%p174) target = $region24
    $region23: #{tpu_custom_call.1} parent=5 // pred_region
      // Predicated region
      $region25: #{tpu_custom_call.1} parent=23 // pred_check
        %p177 = pneg %p44
      $region26: #{tpu_custom_call.1} parent=23 // pred_check_branch
        %179 = sbr.rel (%p177) target = $region28
      $region27: #{tpu_custom_call.1} parent=23 // pred_region
        %s180 = smul.u32 8, %s18
        %s181 = ssub.s32 18, %s180
        %p182 = scmp.lt.s32.totalorder %s181, 8
        %s183 = scalar_select %p182, %s181, 8
        %s184 = smul.u32 128, %s183
        %s185 = smul.u32 %s184, 3
        %p186 = scmp.lt.s32.totalorder %s17, 1
        %s187 = scalar_select %p186, %s17, 1
        %p188 = scmp.lt.s32.totalorder %s180, 17
        %s189 = scalar_select %p188, %s180, 17
        %s190 = smul.addr %s189, 3
        %s191 = smul.addr %s187, 54
        %s192 = sadd.s32 %s190, %s191
        %s193 = smul.addr %s192, 8
        %s194 = scalar_lea.vmem %s0, %s193
        %s195 = smul.u32 8, %s18
        %s196 = ssub.s32 18, %s195
        %p197 = scmp.lt.s32.totalorder %s196, 8
        %s198 = scalar_select %p197, %s196, 8
        %s199 = smul.u32 128, %s198
        %s200 = smul.u32 %s199, 3
      $region28: #{tpu_custom_call.1} parent=23 // pred_fallthru
        _
      // Predicated region
      $region29: #{tpu_custom_call.1} parent=23 // pred_check
        %p201 = pneg %p76
      $region30: #{tpu_custom_call.1} parent=23 // pred_check_branch
        %203 = sbr.rel (%p201) target = $region32
      $region31: #{tpu_custom_call.1} parent=23 // pred_region
        %s204 = sadd.s32 %s18, 1
        %s205 = smul.u32 %s204, 4
        %s206 = smul.u32 2, %s205
        %p207 = scmp.lt.s32.totalorder %s17, 1
        %s208 = scalar_select %p207, %s17, 1
        %p209 = scmp.lt.s32.totalorder %s206, 17
        %s210 = scalar_select %p209, %s206, 17
        %s211 = smul.addr %s210, 3
        %s212 = smul.addr %s208, 54
        %s213 = sadd.s32 %s211, %s212
        %s214 = smul.addr %s213, 8
        %s215 = scalar_lea.vmem %s1, %s214
        %s216 = sadd.s32 %s18, 1
        %s217 = smul.u32 %s216, 4
        %s218 = smul.u32 2, %s217
      $region32: #{tpu_custom_call.1} parent=23 // pred_fallthru
        _
    $region24: #{tpu_custom_call.1} parent=5 // pred_fallthru
      _
    %p219 = scmp.le.s32.totalorder 1, %s10
    %p220 = scmp.lt.s32.totalorder %s10, 5
    %p221 = pnand %p219, %p220
    %p222 = pneg %p221
    // Predicated region
    $region33: #{tpu_custom_call.1} parent=5 // pred_check
      _
    $region34: #{tpu_custom_call.1} parent=5 // pred_check_branch
      %224 = sbr.rel (%p221) target = $region36
    $region35: #{tpu_custom_call.1} parent=5 // pred_region
      %s225 = ssub.s32 %s10, 1
      %s226 = smul.u32 8, %s20
      %s227 = ssub.s32 18, %s226
      %p228 = scmp.lt.s32.totalorder %s227, 8
      %s229 = scalar_select %p228, %s227, 8
      %s230 = smul.u32 128, %s229
      %s231 = smul.u32 %s230, 3
      %p232 = scmp.lt.s32.totalorder %s19, 1
      %s233 = scalar_select %p232, %s19, 1
      %p234 = scmp.lt.s32.totalorder %s226, 17
      %s235 = scalar_select %p234, %s226, 17
      %s236 = smul.addr %s235, 3
      %s237 = smul.addr %s233, 54
      %s238 = sadd.s32 %s236, %s237
      %s239 = smul.addr %s238, 8
      %s240 = scalar_lea.vmem %s0, %s239
      %p241 = pneg %p50
      %p242 = pneg %p47
      %s243 = sadd.s32 %s20, 1
      %s244 = smul.u32 %s243, 4
      %s245 = smul.u32 2, %s244
      %p246 = scmp.lt.s32.totalorder %s19, 1
      %s247 = scalar_select %p246, %s19, 1
      %p248 = scmp.lt.s32.totalorder %s245, 17
      %s249 = scalar_select %p248, %s245, 17
      %s250 = smul.addr %s249, 3
      %s251 = smul.addr %s247, 54
      %s252 = sadd.s32 %s250, %s251
      %s253 = smul.addr %s252, 8
      %s254 = scalar_lea.vmem %s1, %s253
      %p255 = pneg %p82
      %p256 = pneg %p79
      %p257 = pneg %p103
      %p258 = pneg %p100
      %p259 = pneg %p124
      %p260 = pneg %p121
      %p261 = pneg %p152
      %p262 = pneg %p149
      %s263 = smul.u32 8, %s20
      %p264 = scmp.lt.s32.totalorder %s19, 1
      %s265 = scalar_select %p264, %s19, 1
      %p266 = scmp.lt.s32.totalorder %s263, 15
      %s267 = scalar_select %p266, %s263, 15
      %s268 = smul.addr %s267, 2
      %s269 = smul.addr %s265, 32
      %s270 = sadd.s32 %s268, %s269
      %s271 = smul.addr %s270, 8
      %s272 = scalar_lea.vmem %s4, %s271
      %s273 = smul.u32 8, %s20
      %s274 = ssub.s32 18, %s273
      %p275 = scmp.lt.s32.totalorder %s274, 8
      %s276 = scalar_select %p275, %s274, 8
      %s277 = smul.u32 128, %s276
      %s278 = smul.u32 %s277, 3
      %p279 = scmp.lt.s32.totalorder %s19, 1
      %s280 = scalar_select %p279, %s19, 1
      %p281 = scmp.lt.s32.totalorder %s273, 17
      %s282 = scalar_select %p281, %s273, 17
      %s283 = smul.addr %s282, 3
      %s284 = smul.addr %s280, 54
      %s285 = sadd.s32 %s283, %s284
      %s286 = smul.addr %s285, 8
      %s287 = scalar_lea.vmem %s0, %s286
      %s288 = smul.u32 8, %s20
      %s289 = ssub.s32 18, %s288
      %p290 = scmp.lt.s32.totalorder %s289, 8
      %s291 = scalar_select %p290, %s289, 8
      %s292 = smul.u32 128, %s291
      %s293 = smul.u32 %s292, 3
      %s294 = sadd.s32 %s20, 1
      %s295 = smul.u32 %s294, 4
      %s296 = smul.u32 2, %s295
      %p297 = scmp.lt.s32.totalorder %s19, 1
      %s298 = scalar_select %p297, %s19, 1
      %p299 = scmp.lt.s32.totalorder %s296, 17
      %s300 = scalar_select %p299, %s296, 17
      %s301 = smul.addr %s300, 3
      %s302 = smul.addr %s298, 54
      %s303 = sadd.s32 %s301, %s302
      %s304 = smul.addr %s303, 8
      %s305 = scalar_lea.vmem %s1, %s304
      %s306 = sadd.s32 %s20, 1
      %s307 = smul.u32 %s306, 4
      %s308 = smul.u32 2, %s307
      %s309 = smul.u32 8, %s20
      %p310 = scmp.lt.s32.totalorder %s19, 1
      %s311 = scalar_select %p310, %s19, 1
      %p312 = scmp.lt.s32.totalorder %s309, 15
      %s313 = scalar_select %p312, %s309, 15
      %s314 = smul.addr %s313, 2
      %s315 = smul.addr %s311, 32
      %s316 = sadd.s32 %s314, %s315
      %s317 = smul.addr %s316, 8
      %s318 = scalar_lea.vmem %s4, %s317
      %s319 = smul.u32 8, %s20
      %v320 = vld [vmem:[%s287] sm:$0xff]
      %v321 = vld [vmem:[%s287 + $0x8] sm:$0xff]
      %v322 = vld [vmem:[%s287 + $0x18] sm:$0xff]
      %v323 = vld [vmem:[%s287 + $0x20] sm:$0xff]
      %v324 = vld [vmem:[%s287 + $0x30] sm:$0xff]
      %v325 = vld [vmem:[%s287 + $0x38] sm:$0xff]
      %v326 = vld [vmem:[%s287 + $0x48] sm:$0xff]
      %v327 = vld [vmem:[%s287 + $0x50] sm:$0xff]
      %v328 = vld [vmem:[%s287 + $0x60] sm:$0xff]
      %v329 = vld [vmem:[%s287 + $0x68] sm:$0xff]
      %v330 = vld [vmem:[%s287 + $0x78] sm:$0xff]
      %v331 = vld [vmem:[%s287 + $0x80] sm:$0xff]
      %v332 = vld [vmem:[%s287 + $0x90] sm:$0xff]
      %v333 = vld [vmem:[%s287 + $0x98] sm:$0xff]
      %v334 = vld [vmem:[%s287 + $0xa8] sm:$0xff]
      %v335 = vld [vmem:[%s287 + $0xb0] sm:$0xff]
      %vm336 = vcmask 31744
      %337 = vst.msk [vmem:[#allocation2] sm:$0xff] %vm336, %v320
      %338 = vst.msk [vmem:[#allocation2 + $0x8] sm:$0xff] %vm336, %v321
      %339 = vst.msk [vmem:[#allocation2 + $0x10] sm:$0xff] %vm336, %v322
      %340 = vst.msk [vmem:[#allocation2 + $0x18] sm:$0xff] %vm336, %v323
      %341 = vst.msk [vmem:[#allocation2 + $0x20] sm:$0xff] %vm336, %v324
      %342 = vst.msk [vmem:[#allocation2 + $0x28] sm:$0xff] %vm336, %v325
      %343 = vst.msk [vmem:[#allocation2 + $0x30] sm:$0xff] %vm336, %v326
      %344 = vst.msk [vmem:[#allocation2 + $0x38] sm:$0xff] %vm336, %v327
      %345 = vst.msk [vmem:[#allocation2 + $0x40] sm:$0xff] %vm336, %v328
      %346 = vst.msk [vmem:[#allocation2 + $0x48] sm:$0xff] %vm336, %v329
      %347 = vst.msk [vmem:[#allocation2 + $0x50] sm:$0xff] %vm336, %v330
      %348 = vst.msk [vmem:[#allocation2 + $0x58] sm:$0xff] %vm336, %v331
      %349 = vst.msk [vmem:[#allocation2 + $0x60] sm:$0xff] %vm336, %v332
      %350 = vst.msk [vmem:[#allocation2 + $0x68] sm:$0xff] %vm336, %v333
      %351 = vst.msk [vmem:[#allocation2 + $0x70] sm:$0xff] %vm336, %v334
      %352 = vst.msk [vmem:[#allocation2 + $0x78] sm:$0xff] %vm336, %v335
      %v353 = vld [vmem:[%s305] sm:$0xff]
      %v354 = vld [vmem:[%s305 + $0x8] sm:$0xff]
      %v355 = vld [vmem:[%s305 + $0x18] sm:$0xff]
      %v356 = vld [vmem:[%s305 + $0x20] sm:$0xff]
      %s357 = scalar_lea.vmem [#allocation2], 128
      %358 = vst.msk [vmem:[%s357] sm:$0xff] %vm336, %v353
      %359 = vst.msk [vmem:[%s357 + $0x8] sm:$0xff] %vm336, %v354
      %360 = vst.msk [vmem:[%s357 + $0x10] sm:$0xff] %vm336, %v355
      %361 = vst.msk [vmem:[%s357 + $0x18] sm:$0xff] %vm336, %v356
      %v362 = vld [vmem:[%s287 + $0x1] sm:$0xff]
      %v363 = vld [vmem:[%s287 + $0x9] sm:$0xff]
      %v364 = vld [vmem:[%s287 + $0x19] sm:$0xff]
      %v365 = vld [vmem:[%s287 + $0x21] sm:$0xff]
      %v366 = vld [vmem:[%s287 + $0x31] sm:$0xff]
      %v367 = vld [vmem:[%s287 + $0x39] sm:$0xff]
      %v368 = vld [vmem:[%s287 + $0x49] sm:$0xff]
      %v369 = vld [vmem:[%s287 + $0x51] sm:$0xff]
      %v370 = vld [vmem:[%s287 + $0x61] sm:$0xff]
      %v371 = vld [vmem:[%s287 + $0x69] sm:$0xff]
      %v372 = vld [vmem:[%s287 + $0x79] sm:$0xff]
      %v373 = vld [vmem:[%s287 + $0x81] sm:$0xff]
      %v374 = vld [vmem:[%s287 + $0x91] sm:$0xff]
      %v375 = vld [vmem:[%s287 + $0x99] sm:$0xff]
      %v376 = vld [vmem:[%s287 + $0xa9] sm:$0xff]
      %v377 = vld [vmem:[%s287 + $0xb1] sm:$0xff]
      %394 = vrot.lane.b32.xlu0 %v362, 4
      %v395 = vpop.permute.xlu0 %394
      %396 = vrot.lane.b32.xlu0 %v363, 4
      %v397 = vpop.permute.xlu0 %396
      %398 = vrot.lane.b32.xlu0 %v364, 4
      %v399 = vpop.permute.xlu0 %398
      %400 = vrot.lane.b32.xlu0 %v365, 4
      %v401 = vpop.permute.xlu0 %400
      %402 = vrot.lane.b32.xlu0 %v366, 4
      %v403 = vpop.permute.xlu0 %402
      %404 = vrot.lane.b32.xlu0 %v367, 4
      %v405 = vpop.permute.xlu0 %404
      %406 = vrot.lane.b32.xlu0 %v368, 4
      %v407 = vpop.permute.xlu0 %406
      %408 = vrot.lane.b32.xlu0 %v369, 4
      %v409 = vpop.permute.xlu0 %408
      %410 = vrot.lane.b32.xlu0 %v370, 4
      %v411 = vpop.permute.xlu0 %410
      %412 = vrot.lane.b32.xlu0 %v371, 4
      %v413 = vpop.permute.xlu0 %412
      %414 = vrot.lane.b32.xlu0 %v372, 4
      %v415 = vpop.permute.xlu0 %414
      %416 = vrot.lane.b32.xlu0 %v373, 4
      %v417 = vpop.permute.xlu0 %416
      %418 = vrot.lane.b32.xlu0 %v374, 4
      %v419 = vpop.permute.xlu0 %418
      %420 = vrot.lane.b32.xlu0 %v375, 4
      %v421 = vpop.permute.xlu0 %420
      %422 = vrot.lane.b32.xlu0 %v376, 4
      %v423 = vpop.permute.xlu0 %422
      %424 = vrot.lane.b32.xlu0 %v377, 4
      %v425 = vpop.permute.xlu0 %424
      %vm442 = vcmask 64544
      %443 = vst.msk [vmem:[#allocation2] sm:$0xff] %vm442, %v395
      %444 = vst.msk [vmem:[#allocation2 + $0x8] sm:$0xff] %vm442, %v397
      %445 = vst.msk [vmem:[#allocation2 + $0x10] sm:$0xff] %vm442, %v399
      %446 = vst.msk [vmem:[#allocation2 + $0x18] sm:$0xff] %vm442, %v401
      %447 = vst.msk [vmem:[#allocation2 + $0x20] sm:$0xff] %vm442, %v403
      %448 = vst.msk [vmem:[#allocation2 + $0x28] sm:$0xff] %vm442, %v405
      %449 = vst.msk [vmem:[#allocation2 + $0x30] sm:$0xff] %vm442, %v407
      %450 = vst.msk [vmem:[#allocation2 + $0x38] sm:$0xff] %vm442, %v409
      %451 = vst.msk [vmem:[#allocation2 + $0x40] sm:$0xff] %vm442, %v411
      %452 = vst.msk [vmem:[#allocation2 + $0x48] sm:$0xff] %vm442, %v413
      %453 = vst.msk [vmem:[#allocation2 + $0x50] sm:$0xff] %vm442, %v415
      %454 = vst.msk [vmem:[#allocation2 + $0x58] sm:$0xff] %vm442, %v417
      %455 = vst.msk [vmem:[#allocation2 + $0x60] sm:$0xff] %vm442, %v419
      %456 = vst.msk [vmem:[#allocation2 + $0x68] sm:$0xff] %vm442, %v421
      %457 = vst.msk [vmem:[#allocation2 + $0x70] sm:$0xff] %vm442, %v423
      %458 = vst.msk [vmem:[#allocation2 + $0x78] sm:$0xff] %vm442, %v425
      %v459 = vld [vmem:[%s305 + $0x1] sm:$0xff]
      %v460 = vld [vmem:[%s305 + $0x9] sm:$0xff]
      %v461 = vld [vmem:[%s305 + $0x19] sm:$0xff]
      %v462 = vld [vmem:[%s305 + $0x21] sm:$0xff]
      %467 = vrot.lane.b32.xlu0 %v459, 4
      %v468 = vpop.permute.xlu0 %467
      %469 = vrot.lane.b32.xlu0 %v460, 4
      %v470 = vpop.permute.xlu0 %469
      %471 = vrot.lane.b32.xlu0 %v461, 4
      %v472 = vpop.permute.xlu0 %471
      %473 = vrot.lane.b32.xlu0 %v462, 4
      %v474 = vpop.permute.xlu0 %473
      %479 = vst.msk [vmem:[%s357] sm:$0xff] %vm442, %v468
      %480 = vst.msk [vmem:[%s357 + $0x8] sm:$0xff] %vm442, %v470
      %481 = vst.msk [vmem:[%s357 + $0x10] sm:$0xff] %vm442, %v472
      %482 = vst.msk [vmem:[%s357 + $0x18] sm:$0xff] %vm442, %v474
      %v483 = vld [vmem:[%s287 + $0x2] sm:$0xff]
      %v484 = vld [vmem:[%s287 + $0xa] sm:$0xff]
      %v485 = vld [vmem:[%s287 + $0x1a] sm:$0xff]
      %v486 = vld [vmem:[%s287 + $0x22] sm:$0xff]
      %v487 = vld [vmem:[%s287 + $0x32] sm:$0xff]
      %v488 = vld [vmem:[%s287 + $0x3a] sm:$0xff]
      %v489 = vld [vmem:[%s287 + $0x4a] sm:$0xff]
      %v490 = vld [vmem:[%s287 + $0x52] sm:$0xff]
      %v491 = vld [vmem:[%s287 + $0x62] sm:$0xff]
      %v492 = vld [vmem:[%s287 + $0x6a] sm:$0xff]
      %v493 = vld [vmem:[%s287 + $0x7a] sm:$0xff]
      %v494 = vld [vmem:[%s287 + $0x82] sm:$0xff]
      %v495 = vld [vmem:[%s287 + $0x92] sm:$0xff]
      %v496 = vld [vmem:[%s287 + $0x9a] sm:$0xff]
      %v497 = vld [vmem:[%s287 + $0xaa] sm:$0xff]
      %v498 = vld [vmem:[%s287 + $0xb2] sm:$0xff]
      %515 = vrot.lane.b32.xlu0 %v483, 8
      %v516 = vpop.permute.xlu0 %515
      %517 = vrot.lane.b32.xlu0 %v484, 8
      %v518 = vpop.permute.xlu0 %517
      %519 = vrot.lane.b32.xlu0 %v485, 8
      %v520 = vpop.permute.xlu0 %519
      %521 = vrot.lane.b32.xlu0 %v486, 8
      %v522 = vpop.permute.xlu0 %521
      %523 = vrot.lane.b32.xlu0 %v487, 8
      %v524 = vpop.permute.xlu0 %523
      %525 = vrot.lane.b32.xlu0 %v488, 8
      %v526 = vpop.permute.xlu0 %525
      %527 = vrot.lane.b32.xlu0 %v489, 8
      %v528 = vpop.permute.xlu0 %527
      %529 = vrot.lane.b32.xlu0 %v490, 8
      %v530 = vpop.permute.xlu0 %529
      %531 = vrot.lane.b32.xlu0 %v491, 8
      %v532 = vpop.permute.xlu0 %531
      %533 = vrot.lane.b32.xlu0 %v492, 8
      %v534 = vpop.permute.xlu0 %533
      %535 = vrot.lane.b32.xlu0 %v493, 8
      %v536 = vpop.permute.xlu0 %535
      %537 = vrot.lane.b32.xlu0 %v494, 8
      %v538 = vpop.permute.xlu0 %537
      %539 = vrot.lane.b32.xlu0 %v495, 8
      %v540 = vpop.permute.xlu0 %539
      %541 = vrot.lane.b32.xlu0 %v496, 8
      %v542 = vpop.permute.xlu0 %541
      %543 = vrot.lane.b32.xlu0 %v497, 8
      %v544 = vpop.permute.xlu0 %543
      %545 = vrot.lane.b32.xlu0 %v498, 8
      %v546 = vpop.permute.xlu0 %545
      %vm563 = vcmask 97344
      %564 = vst.msk [vmem:[#allocation2] sm:$0xff] %vm563, %v516
      %565 = vst.msk [vmem:[#allocation2 + $0x8] sm:$0xff] %vm563, %v518
      %566 = vst.msk [vmem:[#allocation2 + $0x10] sm:$0xff] %vm563, %v520
      %567 = vst.msk [vmem:[#allocation2 + $0x18] sm:$0xff] %vm563, %v522
      %568 = vst.msk [vmem:[#allocation2 + $0x20] sm:$0xff] %vm563, %v524
      %569 = vst.msk [vmem:[#allocation2 + $0x28] sm:$0xff] %vm563, %v526
      %570 = vst.msk [vmem:[#allocation2 + $0x30] sm:$0xff] %vm563, %v528
      %571 = vst.msk [vmem:[#allocation2 + $0x38] sm:$0xff] %vm563, %v530
      %572 = vst.msk [vmem:[#allocation2 + $0x40] sm:$0xff] %vm563, %v532
      %573 = vst.msk [vmem:[#allocation2 + $0x48] sm:$0xff] %vm563, %v534
      %574 = vst.msk [vmem:[#allocation2 + $0x50] sm:$0xff] %vm563, %v536
      %575 = vst.msk [vmem:[#allocation2 + $0x58] sm:$0xff] %vm563, %v538
      %576 = vst.msk [vmem:[#allocation2 + $0x60] sm:$0xff] %vm563, %v540
      %577 = vst.msk [vmem:[#allocation2 + $0x68] sm:$0xff] %vm563, %v542
      %578 = vst.msk [vmem:[#allocation2 + $0x70] sm:$0xff] %vm563, %v544
      %579 = vst.msk [vmem:[#allocation2 + $0x78] sm:$0xff] %vm563, %v546
      %v580 = vld [vmem:[%s305 + $0x2] sm:$0xff]
      %v581 = vld [vmem:[%s305 + $0xa] sm:$0xff]
      %v582 = vld [vmem:[%s305 + $0x1a] sm:$0xff]
      %v583 = vld [vmem:[%s305 + $0x22] sm:$0xff]
      %588 = vrot.lane.b32.xlu0 %v580, 8
      %v589 = vpop.permute.xlu0 %588
      %590 = vrot.lane.b32.xlu0 %v581, 8
      %v591 = vpop.permute.xlu0 %590
      %592 = vrot.lane.b32.xlu0 %v582, 8
      %v593 = vpop.permute.xlu0 %592
      %594 = vrot.lane.b32.xlu0 %v583, 8
      %v595 = vpop.permute.xlu0 %594
      %600 = vst.msk [vmem:[%s357] sm:$0xff] %vm563, %v589
      %601 = vst.msk [vmem:[%s357 + $0x8] sm:$0xff] %vm563, %v591
      %602 = vst.msk [vmem:[%s357 + $0x10] sm:$0xff] %vm563, %v593
      %603 = vst.msk [vmem:[%s357 + $0x18] sm:$0xff] %vm563, %v595
      %v604 = vld [vmem:[#allocation2] sm:$0xff]
      %v605 = vld [vmem:[#allocation2 + $0x8] sm:$0xff]
      %v606 = vld [vmem:[#allocation2 + $0x10] sm:$0xff]
      %v607 = vld [vmem:[#allocation2 + $0x18] sm:$0xff]
      %v608 = vld [vmem:[#allocation2 + $0x20] sm:$0xff]
      %v609 = vld [vmem:[#allocation2 + $0x28] sm:$0xff]
      %v610 = vld [vmem:[#allocation2 + $0x30] sm:$0xff]
      %v611 = vld [vmem:[#allocation2 + $0x38] sm:$0xff]
      %v612 = vld [vmem:[#allocation2 + $0x40] sm:$0xff]
      %v613 = vld [vmem:[#allocation2 + $0x48] sm:$0xff]
      %v614 = vld [vmem:[#allocation2 + $0x50] sm:$0xff]
      %v615 = vld [vmem:[#allocation2 + $0x58] sm:$0xff]
      %v616 = vld [vmem:[#allocation2 + $0x60] sm:$0xff]
      %v617 = vld [vmem:[#allocation2 + $0x68] sm:$0xff]
      %v618 = vld [vmem:[#allocation2 + $0x70] sm:$0xff]
      %v619 = vld [vmem:[#allocation2 + $0x78] sm:$0xff]
      %vm620 = vcmask 97280
      %621 = vst.msk [vmem:[#allocation3] sm:$0xff] %vm620, %v604
      %622 = vst.msk [vmem:[#allocation3 + $0x8] sm:$0xff] %vm620, %v605
      %623 = vst.msk [vmem:[#allocation3 + $0x10] sm:$0xff] %vm620, %v606
      %624 = vst.msk [vmem:[#allocation3 + $0x18] sm:$0xff] %vm620, %v607
      %625 = vst.msk [vmem:[#allocation3 + $0x20] sm:$0xff] %vm620, %v608
      %626 = vst.msk [vmem:[#allocation3 + $0x28] sm:$0xff] %vm620, %v609
      %627 = vst.msk [vmem:[#allocation3 + $0x30] sm:$0xff] %vm620, %v610
      %628 = vst.msk [vmem:[#allocation3 + $0x38] sm:$0xff] %vm620, %v611
      %629 = vst.msk [vmem:[#allocation3 + $0x40] sm:$0xff] %vm620, %v612
      %630 = vst.msk [vmem:[#allocation3 + $0x48] sm:$0xff] %vm620, %v613
      %631 = vst.msk [vmem:[#allocation3 + $0x50] sm:$0xff] %vm620, %v614
      %632 = vst.msk [vmem:[#allocation3 + $0x58] sm:$0xff] %vm620, %v615
      %633 = vst.msk [vmem:[#allocation3 + $0x60] sm:$0xff] %vm620, %v616
      %634 = vst.msk [vmem:[#allocation3 + $0x68] sm:$0xff] %vm620, %v617
      %635 = vst.msk [vmem:[#allocation3 + $0x70] sm:$0xff] %vm620, %v618
      %636 = vst.msk [vmem:[#allocation3 + $0x78] sm:$0xff] %vm620, %v619
      %s637 = scalar_lea.vmem [#allocation2], 16
      %v638 = vld [vmem:[%s637] sm:$0xff]
      %v639 = vld [vmem:[%s637 + $0x8] sm:$0xff]
      %v640 = vld [vmem:[%s637 + $0x10] sm:$0xff]
      %v641 = vld [vmem:[%s637 + $0x18] sm:$0xff]
      %v642 = vld [vmem:[%s637 + $0x20] sm:$0xff]
      %v643 = vld [vmem:[%s637 + $0x28] sm:$0xff]
      %v644 = vld [vmem:[%s637 + $0x30] sm:$0xff]
      %v645 = vld [vmem:[%s637 + $0x38] sm:$0xff]
      %v646 = vld [vmem:[%s637 + $0x40] sm:$0xff]
      %v647 = vld [vmem:[%s637 + $0x48] sm:$0xff]
      %v648 = vld [vmem:[%s637 + $0x50] sm:$0xff]
      %v649 = vld [vmem:[%s637 + $0x58] sm:$0xff]
      %v650 = vld [vmem:[%s637 + $0x60] sm:$0xff]
      %v651 = vld [vmem:[%s637 + $0x68] sm:$0xff]
      %v652 = vld [vmem:[%s637 + $0x70] sm:$0xff]
      %v653 = vld [vmem:[%s637 + $0x78] sm:$0xff]
      %670 = vrot.lane.b32.xlu0 %v638, 12
      %v671 = vpop.permute.xlu0 %670
      %672 = vrot.lane.b32.xlu0 %v639, 12
      %v673 = vpop.permute.xlu0 %672
      %674 = vrot.lane.b32.xlu0 %v640, 12
      %v675 = vpop.permute.xlu0 %674
      %676 = vrot.lane.b32.xlu0 %v641, 12
      %v677 = vpop.permute.xlu0 %676
      %678 = vrot.lane.b32.xlu0 %v642, 12
      %v679 = vpop.permute.xlu0 %678
      %680 = vrot.lane.b32.xlu0 %v643, 12
      %v681 = vpop.permute.xlu0 %680
      %682 = vrot.lane.b32.xlu0 %v644, 12
      %v683 = vpop.permute.xlu0 %682
      %684 = vrot.lane.b32.xlu0 %v645, 12
      %v685 = vpop.permute.xlu0 %684
      %686 = vrot.lane.b32.xlu0 %v646, 12
      %v687 = vpop.permute.xlu0 %686
      %688 = vrot.lane.b32.xlu0 %v647, 12
      %v689 = vpop.permute.xlu0 %688
      %690 = vrot.lane.b32.xlu0 %v648, 12
      %v691 = vpop.permute.xlu0 %690
      %692 = vrot.lane.b32.xlu0 %v649, 12
      %v693 = vpop.permute.xlu0 %692
      %694 = vrot.lane.b32.xlu0 %v650, 12
      %v695 = vpop.permute.xlu0 %694
      %696 = vrot.lane.b32.xlu0 %v651, 12
      %v697 = vpop.permute.xlu0 %696
      %698 = vrot.lane.b32.xlu0 %v652, 12
      %v699 = vpop.permute.xlu0 %698
      %700 = vrot.lane.b32.xlu0 %v653, 12
      %v701 = vpop.permute.xlu0 %700
      %vm718 = vcmask 195680
      %719 = vst.msk [vmem:[#allocation3] sm:$0xff] %vm718, %v671
      %720 = vst.msk [vmem:[#allocation3 + $0x8] sm:$0xff] %vm718, %v673
      %721 = vst.msk [vmem:[#allocation3 + $0x10] sm:$0xff] %vm718, %v675
      %722 = vst.msk [vmem:[#allocation3 + $0x18] sm:$0xff] %vm718, %v677
      %723 = vst.msk [vmem:[#allocation3 + $0x20] sm:$0xff] %vm718, %v679
      %724 = vst.msk [vmem:[#allocation3 + $0x28] sm:$0xff] %vm718, %v681
      %725 = vst.msk [vmem:[#allocation3 + $0x30] sm:$0xff] %vm718, %v683
      %726 = vst.msk [vmem:[#allocation3 + $0x38] sm:$0xff] %vm718, %v685
      %727 = vst.msk [vmem:[#allocation3 + $0x40] sm:$0xff] %vm718, %v687
      %728 = vst.msk [vmem:[#allocation3 + $0x48] sm:$0xff] %vm718, %v689
      %729 = vst.msk [vmem:[#allocation3 + $0x50] sm:$0xff] %vm718, %v691
      %730 = vst.msk [vmem:[#allocation3 + $0x58] sm:$0xff] %vm718, %v693
      %731 = vst.msk [vmem:[#allocation3 + $0x60] sm:$0xff] %vm718, %v695
      %732 = vst.msk [vmem:[#allocation3 + $0x68] sm:$0xff] %vm718, %v697
      %733 = vst.msk [vmem:[#allocation3 + $0x70] sm:$0xff] %vm718, %v699
      %734 = vst.msk [vmem:[#allocation3 + $0x78] sm:$0xff] %vm718, %v701
      %s735 = scalar_lea.vmem [#allocation2], 32
      %v736 = vld [vmem:[%s735] sm:$0xff]
      %v737 = vld [vmem:[%s735 + $0x8] sm:$0xff]
      %v738 = vld [vmem:[%s735 + $0x10] sm:$0xff]
      %v739 = vld [vmem:[%s735 + $0x18] sm:$0xff]
      %v740 = vld [vmem:[%s735 + $0x20] sm:$0xff]
      %v741 = vld [vmem:[%s735 + $0x28] sm:$0xff]
      %v742 = vld [vmem:[%s735 + $0x30] sm:$0xff]
      %v743 = vld [vmem:[%s735 + $0x38] sm:$0xff]
      %v744 = vld [vmem:[%s735 + $0x40] sm:$0xff]
      %v745 = vld [vmem:[%s735 + $0x48] sm:$0xff]
      %v746 = vld [vmem:[%s735 + $0x50] sm:$0xff]
      %v747 = vld [vmem:[%s735 + $0x58] sm:$0xff]
      %v748 = vld [vmem:[%s735 + $0x60] sm:$0xff]
      %v749 = vld [vmem:[%s735 + $0x68] sm:$0xff]
      %v750 = vld [vmem:[%s735 + $0x70] sm:$0xff]
      %v751 = vld [vmem:[%s735 + $0x78] sm:$0xff]
      %768 = vrot.lane.b32.xlu0 %v736, 24
      %v769 = vpop.permute.xlu0 %768
      %770 = vrot.lane.b32.xlu0 %v737, 24
      %v771 = vpop.permute.xlu0 %770
      %772 = vrot.lane.b32.xlu0 %v738, 24
      %v773 = vpop.permute.xlu0 %772
      %774 = vrot.lane.b32.xlu0 %v739, 24
      %v775 = vpop.permute.xlu0 %774
      %776 = vrot.lane.b32.xlu0 %v740, 24
      %v777 = vpop.permute.xlu0 %776
      %778 = vrot.lane.b32.xlu0 %v741, 24
      %v779 = vpop.permute.xlu0 %778
      %780 = vrot.lane.b32.xlu0 %v742, 24
      %v781 = vpop.permute.xlu0 %780
      %782 = vrot.lane.b32.xlu0 %v743, 24
      %v783 = vpop.permute.xlu0 %782
      %784 = vrot.lane.b32.xlu0 %v744, 24
      %v785 = vpop.permute.xlu0 %784
      %786 = vrot.lane.b32.xlu0 %v745, 24
      %v787 = vpop.permute.xlu0 %786
      %788 = vrot.lane.b32.xlu0 %v746, 24
      %v789 = vpop.permute.xlu0 %788
      %790 = vrot.lane.b32.xlu0 %v747, 24
      %v791 = vpop.permute.xlu0 %790
      %792 = vrot.lane.b32.xlu0 %v748, 24
      %v793 = vpop.permute.xlu0 %792
      %794 = vrot.lane.b32.xlu0 %v749, 24
      %v795 = vpop.permute.xlu0 %794
      %796 = vrot.lane.b32.xlu0 %v750, 24
      %v797 = vpop.permute.xlu0 %796
      %798 = vrot.lane.b32.xlu0 %v751, 24
      %v799 = vpop.permute.xlu0 %798
      %vm816 = vcmask 294080
      %817 = vst.msk [vmem:[#allocation3] sm:$0xff] %vm816, %v769
      %818 = vst.msk [vmem:[#allocation3 + $0x8] sm:$0xff] %vm816, %v771
      %819 = vst.msk [vmem:[#allocation3 + $0x10] sm:$0xff] %vm816, %v773
      %820 = vst.msk [vmem:[#allocation3 + $0x18] sm:$0xff] %vm816, %v775
      %821 = vst.msk [vmem:[#allocation3 + $0x20] sm:$0xff] %vm816, %v777
      %822 = vst.msk [vmem:[#allocation3 + $0x28] sm:$0xff] %vm816, %v779
      %823 = vst.msk [vmem:[#allocation3 + $0x30] sm:$0xff] %vm816, %v781
      %824 = vst.msk [vmem:[#allocation3 + $0x38] sm:$0xff] %vm816, %v783
      %825 = vst.msk [vmem:[#allocation3 + $0x40] sm:$0xff] %vm816, %v785
      %826 = vst.msk [vmem:[#allocation3 + $0x48] sm:$0xff] %vm816, %v787
      %827 = vst.msk [vmem:[#allocation3 + $0x50] sm:$0xff] %vm816, %v789
      %828 = vst.msk [vmem:[#allocation3 + $0x58] sm:$0xff] %vm816, %v791
      %829 = vst.msk [vmem:[#allocation3 + $0x60] sm:$0xff] %vm816, %v793
      %830 = vst.msk [vmem:[#allocation3 + $0x68] sm:$0xff] %vm816, %v795
      %831 = vst.msk [vmem:[#allocation3 + $0x70] sm:$0xff] %vm816, %v797
      %832 = vst.msk [vmem:[#allocation3 + $0x78] sm:$0xff] %vm816, %v799
      %v833 = vld [vmem:[#allocation3] sm:$0xff]
      %v834 = vld [vmem:[#allocation3 + $0x8] sm:$0xff]
      %v835 = vld [vmem:[#allocation3 + $0x10] sm:$0xff]
      %v836 = vld [vmem:[#allocation3 + $0x18] sm:$0xff]
      %v837 = vld [vmem:[#allocation3 + $0x20] sm:$0xff]
      %v838 = vld [vmem:[#allocation3 + $0x28] sm:$0xff]
      %v839 = vld [vmem:[#allocation3 + $0x30] sm:$0xff]
      %v840 = vld [vmem:[#allocation3 + $0x38] sm:$0xff]
      %v841 = vld [vmem:[#allocation3 + $0x40] sm:$0xff]
      %v842 = vld [vmem:[#allocation3 + $0x48] sm:$0xff]
      %v843 = vld [vmem:[#allocation3 + $0x50] sm:$0xff]
      %v844 = vld [vmem:[#allocation3 + $0x58] sm:$0xff]
      %v845 = vld [vmem:[#allocation3 + $0x60] sm:$0xff]
      %v846 = vld [vmem:[#allocation3 + $0x68] sm:$0xff]
      %v847 = vld [vmem:[#allocation3 + $0x70] sm:$0xff]
      %v848 = vld [vmem:[#allocation3 + $0x78] sm:$0xff]
      %v849 = vld [vmem:[%s2] sm:$0xff]
      %v850 = vld [vmem:[%s2 + $0x8] sm:$0xff]
      %v851 = vld [vmem:[%s2 + $0x10] sm:$0xff]
      %v852 = vld [vmem:[%s2 + $0x18] sm:$0xff]
      %v853 = vld [vmem:[%s2 + $0x20] sm:$0xf]
      %v854 = vld [vmem:[%s3] sm:$0x1]
      %v856 = vlaneseq
      %v857 = vshrl.u32 %v856, 7
      %v858 = vsub.s32 0, %v857
      %v859 = vrot.slane %v854, %v858
      %vm861 = vcmask 293888
      %v863 = vsel %vm861, %v833, 0
      %v866 = vsel %vm861, %v834, 0
      %v869 = vsel %vm861, %v835, 0
      %v872 = vsel %vm861, %v836, 0
      %v875 = vsel %vm861, %v837, 0
      %v878 = vsel %vm861, %v838, 0
      %v881 = vsel %vm861, %v839, 0
      %v884 = vsel %vm861, %v840, 0
      %v887 = vsel %vm861, %v841, 0
      %v890 = vsel %vm861, %v842, 0
      %v893 = vsel %vm861, %v843, 0
      %v896 = vsel %vm861, %v844, 0
      %v899 = vsel %vm861, %v845, 0
      %v902 = vsel %vm861, %v846, 0
      %v905 = vsel %vm861, %v847, 0
      %v908 = vsel %vm861, %v848, 0
      %vm910 = vcmask 1043456
      %v912 = vsel %vm910, %v853, 0
      %914 = vmatprep.subr.mxu0 0.0
      %915 = vmatpush1.msra.mxu0 %v849
      %916 = vmatprep.subr.mxu0 0.0
      %917 = vmatpush1.msra.mxu0 %v850
      %918 = vmatprep.subr.mxu0 0.0
      %919 = vmatpush1.msra.mxu0 %v851
      %920 = vmatprep.subr.mxu0 0.0
      %921 = vmatpush1.msra.mxu0 %v852
      %922 = vmatprep.subr.mxu0 0.0
      %923 = vmatpush1.msra.mxu0 %v912
      %924 = vmatprep.subr.mxu0 0.0
      %925 = vmatpush1.msra.mxu0 0.0
      %926 = vmatprep.subr.mxu0 0.0
      %927 = vmatpush1.msra.mxu0 0.0
      %928 = vmatprep.subr.mxu0 0.0
      %929 = vmatpush1.msra.mxu0 0.0
      %930 = vmatprep.subr.mxu0 0.0
      %931 = vmatpush1.msra.mxu0 0.0
      %932 = vmatprep.subr.mxu0 0.0
      %933 = vmatpush1.msra.mxu0 0.0
      %934 = vmatprep.subr.mxu0 0.0
      %935 = vmatpush1.msra.mxu0 0.0
      %936 = vmatprep.subr.mxu0 0.0
      %937 = vmatpush1.msra.mxu0 0.0
      %938 = vmatprep.subr.mxu0 0.0
      %939 = vmatpush1.msra.mxu0 0.0
      %940 = vmatprep.subr.mxu0 0.0
      %941 = vmatpush1.msra.mxu0 0.0
      %942 = vmatprep.subr.mxu0 0.0
      %943 = vmatpush1.msra.mxu0 0.0
      %944 = vmatprep.subr.mxu0 0.0
      %945 = vmatpush1.msra.mxu0 0.0
      %946 = vmatprep.subr.mxu0 0.0
      %947 = vmatpush1.msra.mxu0 0.0
      %948 = vmatprep.subr.mxu0 0.0
      %949 = vmatpush1.msra.mxu0 0.0
      %950 = vmatprep.subr.mxu0 0.0
      %951 = vmatpush1.msra.mxu0 0.0
      %952 = vmatprep.subr.mxu0 0.0
      %953 = vmatpush1.msra.mxu0 0.0
      %954 = vmatprep.subr.mxu0 0.0
      %955 = vmatpush1.msra.mxu0 0.0
      %956 = vmatprep.subr.mxu0 0.0
      %957 = vmatpush1.msra.mxu0 0.0
      %958 = vmatprep.subr.mxu0 0.0
      %959 = vmatpush1.msra.mxu0 0.0
      %960 = vmatprep.subr.mxu0 0.0
      %961 = vmatpush1.msra.mxu0 0.0
      %962 = vmatprep.subr.mxu0 0.0
      %963 = vmatpush1.msra.mxu0 0.0
      %964 = vmatprep.subr.mxu0 0.0
      %965 = vmatpush1.msra.mxu0 0.0
      %966 = vmatprep.subr.mxu0 0.0
      %967 = vmatpush1.msra.mxu0 0.0
      %968 = vmatprep.subr.mxu0 0.0
      %969 = vmatpush1.msra.mxu0 0.0
      %970 = vmatprep.subr.mxu0 0.0
      %971 = vmatpush1.msra.mxu0 0.0
      %972 = vmatprep.subr.mxu0 0.0
      %973 = vmatpush1.msra.mxu0 0.0
      %974 = vmatprep.subr.mxu0 0.0
      %975 = vmatpush1.msra.mxu0 0.0
      %976 = vmatprep.subr.mxu0 0.0
      %977 = vmatpush1.msra.mxu0 0.0
      %978 = vmatprep.mubr.f32.mxu0 0.0
      %979 = vmatmul.mubr.f32.gmra.mrb[0].mxu0 %v863
      %v980 = vpop.f32.mrb[0].mxu0
      %v981 = vadd.f32 %v859, %v980
      %v982 = vpop.f32.mrb[0].mxu0
      %983 = vmatprep.mubr.f32.mxu0 0.0
      %984 = vmatmul.mubr.f32.gmra.mrb[0].mxu0 %v866
      %v985 = vpop.f32.mrb[0].mxu0
      %v986 = vadd.f32 %v859, %v985
      %v987 = vpop.f32.mrb[0].mxu0
      %988 = vmatprep.mubr.f32.mxu0 0.0
      %989 = vmatmul.mubr.f32.gmra.mrb[0].mxu0 %v869
      %v990 = vpop.f32.mrb[0].mxu0
      %v991 = vadd.f32 %v859, %v990
      %v992 = vpop.f32.mrb[0].mxu0
      %993 = vmatprep.mubr.f32.mxu0 0.0
      %994 = vmatmul.mubr.f32.gmra.mrb[0].mxu0 %v872
      %v995 = vpop.f32.mrb[0].mxu0
      %v996 = vadd.f32 %v859, %v995
      %v997 = vpop.f32.mrb[0].mxu0
      %998 = vmatprep.mubr.f32.mxu0 0.0
      %999 = vmatmul.mubr.f32.gmra.mrb[0].mxu0 %v875
      %v1000 = vpop.f32.mrb[0].mxu0
      %v1001 = vadd.f32 %v859, %v1000
      %v1002 = vpop.f32.mrb[0].mxu0
      %1003 = vmatprep.mubr.f32.mxu0 0.0
      %1004 = vmatmul.mubr.f32.gmra.mrb[0].mxu0 %v878
      %v1005 = vpop.f32.mrb[0].mxu0
      %v1006 = vadd.f32 %v859, %v1005
      %v1007 = vpop.f32.mrb[0].mxu0
      %1008 = vmatprep.mubr.f32.mxu0 0.0
      %1009 = vmatmul.mubr.f32.gmra.mrb[0].mxu0 %v881
      %v1010 = vpop.f32.mrb[0].mxu0
      %v1011 = vadd.f32 %v859, %v1010
      %v1012 = vpop.f32.mrb[0].mxu0
      %1013 = vmatprep.mubr.f32.mxu0 0.0
      %1014 = vmatmul.mubr.f32.gmra.mrb[0].mxu0 %v884
      %v1015 = vpop.f32.mrb[0].mxu0
      %v1016 = vadd.f32 %v859, %v1015
      %v1017 = vpop.f32.mrb[0].mxu0
      %1018 = vmatprep.mubr.f32.mxu0 0.0
      %1019 = vmatmul.mubr.f32.gmra.mrb[0].mxu0 %v887
      %v1020 = vpop.f32.mrb[0].mxu0
      %v1021 = vadd.f32 %v859, %v1020
      %v1022 = vpop.f32.mrb[0].mxu0
      %1023 = vmatprep.mubr.f32.mxu0 0.0
      %1024 = vmatmul.mubr.f32.gmra.mrb[0].mxu0 %v890
      %v1025 = vpop.f32.mrb[0].mxu0
      %v1026 = vadd.f32 %v859, %v1025
      %v1027 = vpop.f32.mrb[0].mxu0
      %1028 = vmatprep.mubr.f32.mxu0 0.0
      %1029 = vmatmul.mubr.f32.gmra.mrb[0].mxu0 %v893
      %v1030 = vpop.f32.mrb[0].mxu0
      %v1031 = vadd.f32 %v859, %v1030
      %v1032 = vpop.f32.mrb[0].mxu0
      %1033 = vmatprep.mubr.f32.mxu0 0.0
      %1034 = vmatmul.mubr.f32.gmra.mrb[0].mxu0 %v896
      %v1035 = vpop.f32.mrb[0].mxu0
      %v1036 = vadd.f32 %v859, %v1035
      %v1037 = vpop.f32.mrb[0].mxu0
      %1038 = vmatprep.mubr.f32.mxu0 0.0
      %1039 = vmatmul.mubr.f32.gmra.mrb[0].mxu0 %v899
      %v1040 = vpop.f32.mrb[0].mxu0
      %v1041 = vadd.f32 %v859, %v1040
      %v1042 = vpop.f32.mrb[0].mxu0
      %1043 = vmatprep.mubr.f32.mxu0 0.0
      %1044 = vmatmul.mubr.f32.gmra.mrb[0].mxu0 %v902
      %v1045 = vpop.f32.mrb[0].mxu0
      %v1046 = vadd.f32 %v859, %v1045
      %v1047 = vpop.f32.mrb[0].mxu0
      %1048 = vmatprep.mubr.f32.mxu0 0.0
      %1049 = vmatmul.mubr.f32.gmra.mrb[0].mxu0 %v905
      %v1050 = vpop.f32.mrb[0].mxu0
      %v1051 = vadd.f32 %v859, %v1050
      %v1052 = vpop.f32.mrb[0].mxu0
      %1053 = vmatprep.mubr.f32.mxu0 0.0
      %1054 = vmatmul.mubr.f32.gmra.mrb[0].mxu0 %v908
      %v1055 = vpop.f32.mrb[0].mxu0
      %v1056 = vadd.f32 %v859, %v1055
      %v1057 = vpop.f32.mrb[0].mxu0
      %1058 = vdwg.mxu0
      %v1059 = vmax.f32 %v981, 0.0
      %v1060 = vmax.f32 %v986, 0.0
      %v1061 = vmax.f32 %v991, 0.0
      %v1062 = vmax.f32 %v996, 0.0
      %v1063 = vmax.f32 %v1001, 0.0
      %v1064 = vmax.f32 %v1006, 0.0
      %v1065 = vmax.f32 %v1011, 0.0
      %v1066 = vmax.f32 %v1016, 0.0
      %v1067 = vmax.f32 %v1021, 0.0
      %v1068 = vmax.f32 %v1026, 0.0
      %v1069 = vmax.f32 %v1031, 0.0
      %v1070 = vmax.f32 %v1036, 0.0
      %v1071 = vmax.f32 %v1041, 0.0
      %v1072 = vmax.f32 %v1046, 0.0
      %v1073 = vmax.f32 %v1051, 0.0
      %v1074 = vmax.f32 %v1056, 0.0
      %vm1075 = vcmask 64512
      %1076 = vst.msk [vmem:[%s318] sm:$0xff] %vm1075, %v1059
      %1077 = vst.msk [vmem:[%s318 + $0x8] sm:$0xff] %vm1075, %v1060
      %1078 = vst.msk [vmem:[%s318 + $0x10] sm:$0xff] %vm1075, %v1061
      %1079 = vst.msk [vmem:[%s318 + $0x18] sm:$0xff] %vm1075, %v1062
      %1080 = vst.msk [vmem:[%s318 + $0x20] sm:$0xff] %vm1075, %v1063
      %1081 = vst.msk [vmem:[%s318 + $0x28] sm:$0xff] %vm1075, %v1064
      %1082 = vst.msk [vmem:[%s318 + $0x30] sm:$0xff] %vm1075, %v1065
      %1083 = vst.msk [vmem:[%s318 + $0x38] sm:$0xff] %vm1075, %v1066
      %1084 = vst.msk [vmem:[%s318 + $0x40] sm:$0xff] %vm1075, %v1067
      %1085 = vst.msk [vmem:[%s318 + $0x48] sm:$0xff] %vm1075, %v1068
      %1086 = vst.msk [vmem:[%s318 + $0x50] sm:$0xff] %vm1075, %v1069
      %1087 = vst.msk [vmem:[%s318 + $0x58] sm:$0xff] %vm1075, %v1070
      %1088 = vst.msk [vmem:[%s318 + $0x60] sm:$0xff] %vm1075, %v1071
      %1089 = vst.msk [vmem:[%s318 + $0x68] sm:$0xff] %vm1075, %v1072
      %1090 = vst.msk [vmem:[%s318 + $0x70] sm:$0xff] %vm1075, %v1073
      %1091 = vst.msk [vmem:[%s318 + $0x78] sm:$0xff] %vm1075, %v1074
      %s1092 = smul.u32 8, %s20
      %p1093 = scmp.lt.s32.totalorder %s19, 1
      %s1094 = scalar_select %p1093, %s19, 1
      %p1095 = scmp.lt.s32.totalorder %s1092, 15
      %s1096 = scalar_select %p1095, %s1092, 15
      %s1097 = smul.addr %s1096, 2
      %s1098 = smul.addr %s1094, 32
      %s1099 = sadd.s32 %s1097, %s1098
      %s1100 = smul.addr %s1099, 8
      %s1101 = scalar_lea.vmem %s4, %s1100
      // Predicated region
      $region37: #{tpu_custom_call.1} parent=35 // pred_check
        %p1102 = pneg %p149
      $region38: #{tpu_custom_call.1} parent=35 // pred_check_branch
        %1104 = sbr.rel (%p1102) target = $region40
      $region39: #{tpu_custom_call.1} parent=35 // pred_region
        %s1105 = smul.u32 8, %s20
      $region40: #{tpu_custom_call.1} parent=35 // pred_fallthru
        _
    $region36: #{tpu_custom_call.1} parent=5 // pred_fallthru
      _
    %p1106 = scmp.le.s32.totalorder 2, %s10
    // Predicated region
    $region41: #{tpu_custom_call.1} parent=5 // pred_check
      %p1107 = pneg %p1106
    $region42: #{tpu_custom_call.1} parent=5 // pred_check_branch
      %1109 = sbr.rel (%p1107) target = $region44
    $region43: #{tpu_custom_call.1} parent=5 // pred_region
      %s1110 = ssub.s32 %s10, 2
      // Predicated region
      $region45: #{tpu_custom_call.1} parent=43 // pred_check
        %p1111 = pneg %p155
      $region46: #{tpu_custom_call.1} parent=43 // pred_check_branch
        %1113 = sbr.rel (%p1111) target = $region48
      $region47: #{tpu_custom_call.1} parent=43 // pred_region
        %s1114 = smul.u32 8, %s22
        %p1115 = scmp.lt.s32.totalorder %s21, 1
        %s1116 = scalar_select %p1115, %s21, 1
        %p1117 = scmp.lt.s32.totalorder %s1114, 15
        %s1118 = scalar_select %p1117, %s1114, 15
        %s1119 = smul.addr %s1118, 2
        %s1120 = smul.addr %s1116, 32
        %s1121 = sadd.s32 %s1119, %s1120
        %s1122 = smul.addr %s1121, 8
        %s1123 = scalar_lea.vmem %s4, %s1122
      $region48: #{tpu_custom_call.1} parent=43 // pred_fallthru
        _
    $region44: #{tpu_custom_call.1} parent=5 // pred_fallthru
      _
  $region6: #{tpu_custom_call.1} parent=0 // loop_footer
    %s14 = sadd.s32 1, %s10
  $region7: #{tpu_custom_call.1} parent=0 // loop_footer_branch
    %9 = sbr.rel target = $region3
  $region8: #{tpu_custom_call.1} parent=0 // loop_exit
    _

</llo_original>
